<compile_context>
chip_gen: v5e
topology: v5e:2x2
jax: 0.10.0
libtpu: 0.0.40
codegen_flags: <defaults>
</compile_context>

<pallas_src>
import functools

import jax
import jax.numpy as jnp
import numpy as np
from jax.experimental import pallas as pl
from jax.experimental.pallas import tpu as pltpu

LANES = 128               # lane tile (last dim)
ROW_ALIGN = 32            # block_rows multiple: covers f32 (8,), bf16 (16,), int8 (32,) sublane tiles
ACC_SUBLANES = 32         # accumulator shape (32, 128)
MAX_BLOCK_ROWS = 8192     # hard cap on rows per grid step
PER_STEP_VMEM_BUDGET = 6 * 1024 * 1024   # input-stream bytes per grid step (x2 pipeline buffers)
VMEM_LIMIT_BYTES = 48 * 1024 * 1024      # > v5e 16 MiB scoped default, < v7x 64 MiB physical
NUM_CORE_SPLITS = 2       # leading "parallel" grid axis (v7x has 2 TensorCores)

_LOG2 = 0.6931471805599453


def _masked_logcosh_kernel(pred_ref, true_ref, mask_ref,
                           loss_out_ref, mask_out_ref,
                           loss_acc, mask_acc, *,
                           block_rows, steps_per_split, total_rows, any_tail):
    """Grid: (split, step).  `split` is "parallel" (megacore); `step` reduces."""
    c = pl.program_id(0)
    i = pl.program_id(1)

    @pl.when(i == 0)
    def _():
        loss_acc[...] = jnp.zeros_like(loss_acc)
        mask_acc[...] = jnp.zeros_like(mask_acc)

    # Narrow dtypes are DMA'd as-is and cast to f32 only here, in VMEM.
    p = pred_ref[...].astype(jnp.float32)
    t = true_ref[...].astype(jnp.float32)
    m = mask_ref[...].astype(jnp.float32)

    d = jnp.abs(p - t)
    # Stable log(cosh(d)); exact at d == 0 and never overflows in f32, so masked
    # outliers cannot poison the sums with inf * 0.
    lc = d + jnp.log(1.0 + jnp.exp(-2.0 * d)) - jnp.float32(_LOG2)
    contrib = lc * m

    nb = block_rows // ACC_SUBLANES

    def fold(x):
        # (block_rows, 128) -> (32, 128) with pure VPU adds (layout-free reshape).
        return x.reshape(nb, ACC_SUBLANES, LANES).sum(axis=0)

    if any_tail:
        blk = c * steps_per_split + i
        needs_mask = (blk + 1) * block_rows > total_rows

        @pl.when(jnp.logical_not(needs_mask))
        def _():  # hot path: full in-bounds block -> no iota/compare/select work
            loss_acc[...] += fold(contrib)
            mask_acc[...] += fold(m)

        @pl.when(needs_mask)
        def _():  # ragged / phantom block: select-zero out-of-range rows
            row = blk * block_rows + jax.lax.broadcasted_iota(
                jnp.int32, (block_rows, LANES), 0)
            valid = row < total_rows
            loss_acc[...] += fold(jnp.where(valid, contrib, 0.0))
            mask_acc[...] += fold(jnp.where(valid, m, 0.0))
    else:
        loss_acc[...] += fold(contrib)
        mask_acc[...] += fold(m)

    @pl.when(i == pl.num_programs(1) - 1)
    def _():
        # Lane-dense (1, 32, 128) partial-sum slabs; tiny final cross-lane
        # reduce + divide happen in XLA on the wrapper side.
        loss_out_ref[...] = loss_acc[...].reshape(1, ACC_SUBLANES, LANES)
        mask_out_ref[...] = mask_acc[...].reshape(1, ACC_SUBLANES, LANES)


def _strip_trailing_ones(x, min_ndim=1):
    # Mirrors torch's .squeeze() for the (B, S, 1) layout this module uses, but
    # only strips trailing singleton axes (robust when B == 1 or S == 1).
    while x.ndim > min_ndim and x.shape[-1] == 1:
        x = jnp.squeeze(x, axis=-1)
    return x


def masked_log_cosh(pred, true, mask, *, mask_is_binary=False, max_block_rows=None):
    p = _strip_trailing_ones(pred)
    m = _strip_trailing_ones(mask)
    t = true

    # TODO(synk): when the mask genuinely broadcasts against pred/true, keep it
    # small with its own BlockSpec instead of materializing the broadcast here.
    shape = jnp.broadcast_shapes(p.shape, t.shape, m.shape)
    p = jnp.broadcast_to(p, shape)
    t = jnp.broadcast_to(t, shape)
    m = jnp.broadcast_to(m, shape)

    # Shrink the mask HBM stream where it cannot change semantics.
    if m.dtype == jnp.bool_:
        m = m.astype(jnp.int8)
    elif mask_is_binary and jnp.issubdtype(m.dtype, jnp.floating):
        # Caller asserts the mask is strictly 0/1 -> safe to narrow the stream.
        m = m.astype(jnp.int8)

    n = int(np.prod(shape)) if len(shape) else 1
    p = p.reshape(-1)
    t = t.reshape(-1)
    m = m.reshape(-1)

    # Rows of 128 lanes; floor at one (32, 128) tile so narrow-dtype streams
    # (int8 mask / bf16 pred) respect their minimum tiling.
    rows = max(-(-n // LANES), ROW_ALIGN)
    pad = rows * LANES - n
    if pad:
        # Padded elements have pred == true == mask == 0 -> contribute nothing.
        # TODO(synk): for huge lane-unaligned n this rewrites the arrays once in
        # XLA; an element-granular in-kernel mask / manual-DMA tail would avoid it.
        p = jnp.pad(p, (0, pad))
        t = jnp.pad(t, (0, pad))
        m = jnp.pad(m, (0, pad))

    p2 = p.reshape(rows, LANES)
    t2 = t.reshape(rows, LANES)
    m2 = m.reshape(rows, LANES)

    # Dtype-aware block size: ~PER_STEP_VMEM_BUDGET bytes of input stream per
    # grid step (4096 rows for all-f32, proportionally more for bf16/int8),
    # always a multiple of ROW_ALIGN, capped at MAX_BLOCK_ROWS.
    bytes_per_elem = (p2.dtype.itemsize + t2.dtype.itemsize + m2.dtype.itemsize)
    budget_rows = PER_STEP_VMEM_BUDGET // (LANES * bytes_per_elem)
    budget_rows = max(ROW_ALIGN, (budget_rows // ROW_ALIGN) * ROW_ALIGN)
    budget_rows = min(budget_rows, MAX_BLOCK_ROWS)
    if max_block_rows is not None:   # test / tuning hook
        budget_rows = min(budget_rows,
                          max(ROW_ALIGN, (max_block_rows // ROW_ALIGN) * ROW_ALIGN))
    block_rows = max(ROW_ALIGN, min(budget_rows, (rows // ROW_ALIGN) * ROW_ALIGN))

    total_blocks = -(-rows // block_rows)
    # Split the reduction across TensorCores (2 on v7x); harmless elsewhere.
    num_splits = NUM_CORE_SPLITS if total_blocks >= 2 * NUM_CORE_SPLITS else 1
    steps_per_split = -(-total_blocks // num_splits)
    # Masked (ragged/phantom) blocks exist iff the last real block is partial or
    # the rectangular (splits x steps) grid over-covers total_blocks.
    any_tail = (rows % block_rows != 0) or (num_splits * steps_per_split != total_blocks)

    kern = functools.partial(
        _masked_logcosh_kernel,
        block_rows=block_rows, steps_per_split=steps_per_split,
        total_rows=rows, any_tail=any_tail)

    def in_index_map(c, i):
        # Phantom blocks (only when the grid over-covers) are clamped onto the
        # last real block; the kernel's row mask zeroes their contribution.
        return (jnp.minimum(c * steps_per_split + i, total_blocks - 1), 0)

    in_spec = pl.BlockSpec((block_rows, LANES), in_index_map)
    out_spec = pl.BlockSpec((1, ACC_SUBLANES, LANES), lambda c, i: (c, 0, 0))
    part_shape = jax.ShapeDtypeStruct((num_splits, ACC_SUBLANES, LANES), jnp.float32)

    loss_parts, mask_parts = pl.pallas_call(
        kern,
        out_shape=(part_shape, part_shape),
        grid_spec=pltpu.PrefetchScalarGridSpec(
            num_scalar_prefetch=0,
            grid=(num_splits, steps_per_split),
            in_specs=[in_spec, in_spec, in_spec],
            out_specs=[out_spec, out_spec],
            scratch_shapes=[
                pltpu.VMEM((ACC_SUBLANES, LANES), jnp.float32),  # masked-loss partials
                pltpu.VMEM((ACC_SUBLANES, LANES), jnp.float32),  # mask partials
            ],
        ),
        compiler_params=pltpu.CompilerParams(
            dimension_semantics=("parallel", "arbitrary"),
            vmem_limit_bytes=VMEM_LIMIT_BYTES),
    )(p2, t2, m2)

    loss_sum = jnp.sum(loss_parts, dtype=jnp.float32)
    mask_sum = jnp.sum(mask_parts, dtype=jnp.float32)
    return loss_sum / (mask_sum + jnp.float32(1e-8))


if __name__ == "__main__":
    key = jax.random.PRNGKey(0)
    k1, k2, k3, k4, k5, k6 = jax.random.split(key, 6)

    # Case 1: the module's natural small shapes (single block, single split).
    B, S = 2, 8
    pred = jax.random.normal(k1, (B, S, 1), dtype=jnp.float32)
    true = jax.random.normal(k2, (B, S), dtype=jnp.float32)
    mask = (jax.random.uniform(k3, (B, S, 1)) > 0.3).astype(jnp.float32)

    loss = masked_log_cosh(pred, true, mask)
    jax.block_until_ready(loss)

    p_s = jnp.squeeze(pred, axis=-1)
    m_s = jnp.squeeze(mask, axis=-1)
    ref = jnp.sum(jnp.log(jnp.cosh(p_s - true)) * m_s) / (jnp.sum(m_s) + 1e-8)
    np.testing.assert_allclose(np.asarray(loss), np.asarray(ref),
                               rtol=1e-5, atol=1e-6)

    # Case 2: exercises the multi-block grid, the two-split "parallel" axis,
    # ragged + phantom tail blocks, and the int8 (bool) mask stream.
    # max_block_rows is a test hook to force the multi-step path at small sizes.
    B2, S2 = 4, 4200
    pred2 = jax.random.normal(k4, (B2, S2, 1), dtype=jnp.float32)
    true2 = jax.random.normal(k5, (B2, S2), dtype=jnp.float32)
    mask2 = jax.random.uniform(k6, (B2, S2, 1)) > 0.5          # bool mask

    loss2 = masked_log_cosh(pred2, true2, mask2, max_block_rows=32)
    jax.block_until_ready(loss2)

    m2_s = jnp.squeeze(mask2, -1).astype(jnp.float32)
    ref2 = (jnp.sum(jnp.log(jnp.cosh(jnp.squeeze(pred2, -1) - true2)) * m2_s)
            / (jnp.sum(m2_s) + 1e-8))
    np.testing.assert_allclose(np.asarray(loss2), np.asarray(ref2),
                               rtol=1e-5, atol=1e-5)

    print("KERNEL_OK")
</pallas_src>

<mosaic_0001>
module attributes {stable_mosaic.version = 11 : i64} {
  func.func @_masked_logcosh_kernel(%arg0: i32, %arg1: i32, %arg2: memref<32x128xf32, #tpu.memory_space<vmem>>, %arg3: memref<32x128xf32, #tpu.memory_space<vmem>>, %arg4: memref<32x128xf32, #tpu.memory_space<vmem>>, %arg5: memref<1x32x128xf32, #tpu.memory_space<vmem>>, %arg6: memref<1x32x128xf32, #tpu.memory_space<vmem>>, %arg7: memref<32x128xf32, #tpu.memory_space<vmem>>, %arg8: memref<32x128xf32, #tpu.memory_space<vmem>>) attributes {dimension_semantics = [#tpu.dimension_semantics<parallel>, #tpu.dimension_semantics<arbitrary>], iteration_bounds = array<i64: 1, 1>, scalar_prefetch = 0 : i64, scratch_operands = 2 : i64, tpu.core_type = #tpu.core_type<tc>, window_params = [{transform_indices = @transform_0, window_bounds = array<i64: 32, 128>}, {transform_indices = @transform_1, window_bounds = array<i64: 32, 128>}, {transform_indices = @transform_2, window_bounds = array<i64: 32, 128>}, {transform_indices = @transform_3, window_bounds = array<i64: 1, 32, 128>}, {transform_indices = @transform_4, window_bounds = array<i64: 1, 32, 128>}]} {
    %c0_i32 = arith.constant 0 : i32
    %0 = arith.cmpi eq, %arg1, %c0_i32 : i32
    %1 = arith.extui %0 : i1 to i32
    %c0_i32_0 = arith.constant 0 : i32
    %2 = arith.cmpi ne, %1, %c0_i32_0 : i32
    scf.if %2 {
      %cst_20 = arith.constant 0.000000e+00 : f32
      %31 = vector.broadcast %cst_20 : f32 to vector<32x128xf32>
      %c0_21 = arith.constant 0 : index
      %c0_22 = arith.constant 0 : index
      %32 = vector.load %arg7[%c0_21, %c0_22] : memref<32x128xf32, #tpu.memory_space<vmem>>, vector<32x128xf32>
      tpu.vector_store %arg7[%c0_21, %c0_22], %31 {strides = array<i32>} : memref<32x128xf32, #tpu.memory_space<vmem>>, vector<32x128xf32>,
      %cst_23 = arith.constant 0.000000e+00 : f32
      %33 = vector.broadcast %cst_23 : f32 to vector<32x128xf32>
      %c0_24 = arith.constant 0 : index
      %c0_25 = arith.constant 0 : index
      %34 = vector.load %arg8[%c0_24, %c0_25] : memref<32x128xf32, #tpu.memory_space<vmem>>, vector<32x128xf32>
      tpu.vector_store %arg8[%c0_24, %c0_25], %33 {strides = array<i32>} : memref<32x128xf32, #tpu.memory_space<vmem>>, vector<32x128xf32>,
    } else {
    }
    %c0 = arith.constant 0 : index
    %c0_1 = arith.constant 0 : index
    %3 = vector.load %arg2[%c0, %c0_1] : memref<32x128xf32, #tpu.memory_space<vmem>>, vector<32x128xf32>
    %c0_2 = arith.constant 0 : index
    %c0_3 = arith.constant 0 : index
    %4 = vector.load %arg3[%c0_2, %c0_3] : memref<32x128xf32, #tpu.memory_space<vmem>>, vector<32x128xf32>
    %c0_4 = arith.constant 0 : index
    %c0_5 = arith.constant 0 : index
    %5 = vector.load %arg4[%c0_4, %c0_5] : memref<32x128xf32, #tpu.memory_space<vmem>>, vector<32x128xf32>
    %6 = arith.subf %3, %4 : vector<32x128xf32>
    %7 = math.absf %6 : vector<32x128xf32>
    %cst = arith.constant -2.000000e+00 : f32
    %8 = vector.broadcast %cst : f32 to vector<32x128xf32>
    %9 = arith.mulf %8, %7 : vector<32x128xf32>
    %10 = math.exp %9 : vector<32x128xf32>
    %cst_6 = arith.constant 1.000000e+00 : f32
    %11 = vector.broadcast %cst_6 : f32 to vector<32x128xf32>
    %12 = arith.addf %11, %10 : vector<32x128xf32>
    %13 = math.log %12 : vector<32x128xf32>
    %14 = arith.addf %7, %13 : vector<32x128xf32>
    %cst_7 = arith.constant 0.693147182 : f32
    %15 = vector.broadcast %cst_7 : f32 to vector<32x128xf32>
    %16 = arith.subf %14, %15 : vector<32x128xf32>
    %17 = arith.mulf %16, %5 : vector<32x128xf32>
    %c0_8 = arith.constant 0 : index
    %c0_9 = arith.constant 0 : index
    %18 = vector.load %arg7[%c0_8, %c0_9] : memref<32x128xf32, #tpu.memory_space<vmem>>, vector<32x128xf32>
    %19 = vector.shape_cast %17 : vector<32x128xf32> to vector<1x32x128xf32>
    %cst_10 = arith.constant dense<0.000000e+00> : vector<32x128xf32>
    %20 = vector.multi_reduction <add>, %19, %cst_10 [0] : vector<1x32x128xf32> to vector<32x128xf32>
    %21 = arith.addf %18, %20 : vector<32x128xf32>
    %c0_11 = arith.constant 0 : index
    %c0_12 = arith.constant 0 : index
    %22 = vector.load %arg7[%c0_11, %c0_12] : memref<32x128xf32, #tpu.memory_space<vmem>>, vector<32x128xf32>
    tpu.vector_store %arg7[%c0_11, %c0_12], %21 {strides = array<i32>} : memref<32x128xf32, #tpu.memory_space<vmem>>, vector<32x128xf32>,
    %c0_13 = arith.constant 0 : index
    %c0_14 = arith.constant 0 : index
    %23 = vector.load %arg8[%c0_13, %c0_14] : memref<32x128xf32, #tpu.memory_space<vmem>>, vector<32x128xf32>
    %24 = vector.shape_cast %5 : vector<32x128xf32> to vector<1x32x128xf32>
    %cst_15 = arith.constant dense<0.000000e+00> : vector<32x128xf32>
    %25 = vector.multi_reduction <add>, %24, %cst_15 [0] : vector<1x32x128xf32> to vector<32x128xf32>
    %26 = arith.addf %23, %25 : vector<32x128xf32>
    %c0_16 = arith.constant 0 : index
    %c0_17 = arith.constant 0 : index
    %27 = vector.load %arg8[%c0_16, %c0_17] : memref<32x128xf32, #tpu.memory_space<vmem>>, vector<32x128xf32>
    tpu.vector_store %arg8[%c0_16, %c0_17], %26 {strides = array<i32>} : memref<32x128xf32, #tpu.memory_space<vmem>>, vector<32x128xf32>,
    %c0_i32_18 = arith.constant 0 : i32
    %28 = arith.cmpi eq, %arg1, %c0_i32_18 : i32
    %29 = arith.extui %28 : i1 to i32
    %c0_i32_19 = arith.constant 0 : i32
    %30 = arith.cmpi ne, %29, %c0_i32_19 : i32
    scf.if %30 {
      %c0_20 = arith.constant 0 : index
      %c0_21 = arith.constant 0 : index
      %31 = vector.load %arg7[%c0_20, %c0_21] : memref<32x128xf32, #tpu.memory_space<vmem>>, vector<32x128xf32>
      %32 = vector.shape_cast %31 : vector<32x128xf32> to vector<1x32x128xf32>
      %c0_22 = arith.constant 0 : index
      %c0_23 = arith.constant 0 : index
      %c0_24 = arith.constant 0 : index
      %33 = vector.load %arg5[%c0_22, %c0_23, %c0_24] : memref<1x32x128xf32, #tpu.memory_space<vmem>>, vector<1x32x128xf32>
      tpu.vector_store %arg5[%c0_22, %c0_23, %c0_24], %32 {strides = array<i32>} : memref<1x32x128xf32, #tpu.memory_space<vmem>>, vector<1x32x128xf32>,
      %c0_25 = arith.constant 0 : index
      %c0_26 = arith.constant 0 : index
      %34 = vector.load %arg8[%c0_25, %c0_26] : memref<32x128xf32, #tpu.memory_space<vmem>>, vector<32x128xf32>
      %35 = vector.shape_cast %34 : vector<32x128xf32> to vector<1x32x128xf32>
      %c0_27 = arith.constant 0 : index
      %c0_28 = arith.constant 0 : index
      %c0_29 = arith.constant 0 : index
      %36 = vector.load %arg6[%c0_27, %c0_28, %c0_29] : memref<1x32x128xf32, #tpu.memory_space<vmem>>, vector<1x32x128xf32>
      tpu.vector_store %arg6[%c0_27, %c0_28, %c0_29], %35 {strides = array<i32>} : memref<1x32x128xf32, #tpu.memory_space<vmem>>, vector<1x32x128xf32>,
    } else {
    }
    return
  }
  func.func @transform_0(%arg0: i32, %arg1: i32) -> (i32, i32) {
    %c1_i32 = arith.constant 1 : i32
    %0 = arith.muli %arg0, %c1_i32 : i32
    %1 = arith.addi %0, %arg1 : i32
    %c0_i32 = arith.constant 0 : i32
    %2 = arith.minsi %1, %c0_i32 : i32
    %c0_i32_0 = arith.constant 0 : i32
    %c0_i32_1 = arith.constant 0 : i32
    return %2, %c0_i32_0 : i32, i32
  }
  func.func @transform_1(%arg0: i32, %arg1: i32) -> (i32, i32) {
    %c1_i32 = arith.constant 1 : i32
    %0 = arith.muli %arg0, %c1_i32 : i32
    %1 = arith.addi %0, %arg1 : i32
    %c0_i32 = arith.constant 0 : i32
    %2 = arith.minsi %1, %c0_i32 : i32
    %c0_i32_0 = arith.constant 0 : i32
    %c0_i32_1 = arith.constant 0 : i32
    return %2, %c0_i32_0 : i32, i32
  }
  func.func @transform_2(%arg0: i32, %arg1: i32) -> (i32, i32) {
    %c1_i32 = arith.constant 1 : i32
    %0 = arith.muli %arg0, %c1_i32 : i32
    %1 = arith.addi %0, %arg1 : i32
    %c0_i32 = arith.constant 0 : i32
    %2 = arith.minsi %1, %c0_i32 : i32
    %c0_i32_0 = arith.constant 0 : i32
    %c0_i32_1 = arith.constant 0 : i32
    return %2, %c0_i32_0 : i32, i32
  }
  func.func @transform_3(%arg0: i32, %arg1: i32) -> (i32, i32, i32) {
    %c0_i32 = arith.constant 0 : i32
    %c0_i32_0 = arith.constant 0 : i32
    %c0_i32_1 = arith.constant 0 : i32
    return %arg0, %c0_i32, %c0_i32_0 : i32, i32, i32
  }
  func.func @transform_4(%arg0: i32, %arg1: i32) -> (i32, i32, i32) {
    %c0_i32 = arith.constant 0 : i32
    %c0_i32_0 = arith.constant 0 : i32
    %c0_i32_1 = arith.constant 0 : i32
    return %arg0, %c0_i32, %c0_i32_0 : i32, i32, i32
  }
}

</mosaic_0001>

<llo_original>
// kernel: tpu_custom_call.1
$region0: #{tpu_custom_call.1}
  #allocation0 [shape = 'u32[]', space=smem, size = 0x4, offset = 0x4, fixed_abs, tag = 'smem constant byte address 0x4 - core index']
  #allocation1 [shape = 'u32[72,128]{1,0:T(1,128)}', space=vmem, size = 0x9000, scoped, tag = 'internal scratch']
  #allocation2 [shape = 'f32[32,128]{1,0:T(8,128)}', space=vmem, size = 0x4000, scoped, tag = 'scratch operand']
  #allocation3 [shape = 'f32[32,128]{1,0:T(8,128)}', space=vmem, size = 0x4000, scoped, tag = 'scratch operand']
  %s0 = inlined_call_operand.hbm [shape: f32[32,128], index: 0, kind: input, shape index: {}]
  %s1 = inlined_call_operand.hbm [shape: f32[32,128], index: 1, kind: input, shape index: {}]
  %s2 = inlined_call_operand.hbm [shape: f32[32,128], index: 2, kind: input, shape index: {}]
  %s3 = inlined_call_operand.hbm [shape: f32[1,32,128], index: 3, kind: output, shape index: {0}]
  %s4 = inlined_call_operand.hbm [shape: f32[1,32,128], index: 4, kind: output, shape index: {1}]
  %5 = xla_tuple %s3, %s4
  %s6 = sld [smem:[#allocation0]]
  $region50: #{tpu_custom_call.1} parent=0
    _
  %s8 = ssub.s32 1, %s6
  %s9 = scalar_select 0, %s8, %s6
  $region1: #{tpu_custom_call.1} parent=0
    #allocation4 [shape = 'u8[16384]{0}', space=vmem, size = 0x4000, scoped, tag = 'input window, operand 0, single buffered']
    #allocation5 [shape = 's32[1]{0}', space=sflag, size = 0x4, scoped, tag = 'scoped memory for tpu_custom_call.1']
    #allocation6 [shape = 's32[1]{0}', space=sflag, size = 0x4, scoped, tag = 'scoped memory for tpu_custom_call.1']
    #allocation7 [shape = 'u8[16384]{0}', space=vmem, size = 0x4000, scoped, tag = 'input window, operand 1, single buffered']
    #allocation8 [shape = 's32[1]{0}', space=sflag, size = 0x4, scoped, tag = 'scoped memory for tpu_custom_call.1']
    #allocation9 [shape = 'u8[16384]{0}', space=vmem, size = 0x4000, scoped, tag = 'input window, operand 2, single buffered']
    #allocation10 [shape = 'u8[16384]{0}', space=vmem, size = 0x4000, scoped, tag = 'output window, operand 0, single buffered']
    #allocation11 [shape = 'u8[16384]{0}', space=vmem, size = 0x4000, scoped, tag = 'output window, operand 1, single buffered']
    #allocation12 [shape = 's32[1]{0}', space=sflag, size = 0x4, scoped, tag = 'scoped memory for tpu_custom_call.1']
    %10 = vsyncpa [#allocation5], 0
    %11 = vsyncpa [#allocation8], 0
    %12 = vsyncpa [#allocation6], 0
    %13 = vsyncpa [#allocation12], 0
    // Predicated region
    $region2: #{tpu_custom_call.1} parent=1 // pred_check
      _
    $region3: #{tpu_custom_call.1} parent=1 // pred_check_branch
      %15 = sbr.rel (0) target = $region5
    $region4: #{tpu_custom_call.1} parent=1 // pred_region
      %s16 = sadd.s32 0, 0
      %p17 = scmp.lt.s32.totalorder %s16, 0
      %s18 = scalar_select %p17, %s16, 0
      %s19 = smul.u32 4, %s18
      %21 = vsyncadd [#allocation5], 0
      %s22 = smul.addr %s19, 8
      %s23 = scalar_lea.hbm %s0, %s22
      %s24 = sshll.u32 %s23, 4
      %s25 = int_to_ptr.hbm [resolvable:$true] %s24
      %s26 = sshll.u32 [#allocation4], 4
      %s27 = int_to_ptr.vmem [resolvable:$true] %s26
      %32 = dma.hbm_to_vmem [thread:$0]  %s25, 512, %s27, [#allocation5], 128, 128, 8
    $region5: #{tpu_custom_call.1} parent=1 // pred_fallthru
      _
    // Predicated region
    $region6: #{tpu_custom_call.1} parent=1 // pred_check
      _
    $region7: #{tpu_custom_call.1} parent=1 // pred_check_branch
      %34 = sbr.rel (0) target = $region9
    $region8: #{tpu_custom_call.1} parent=1 // pred_region
      %s35 = sadd.s32 0, 0
      %p36 = scmp.lt.s32.totalorder %s35, 0
      %s37 = scalar_select %p36, %s35, 0
      %s38 = smul.u32 4, %s37
      %40 = vsyncadd [#allocation8], 0
      %s41 = smul.addr %s38, 8
      %s42 = scalar_lea.hbm %s1, %s41
      %s43 = sshll.u32 %s42, 4
      %s44 = int_to_ptr.hbm [resolvable:$true] %s43
      %s45 = sshll.u32 [#allocation7], 4
      %s46 = int_to_ptr.vmem [resolvable:$true] %s45
      %51 = dma.hbm_to_vmem [thread:$0]  %s44, 512, %s46, [#allocation8], 128, 128, 8
    $region9: #{tpu_custom_call.1} parent=1 // pred_fallthru
      _
    // Predicated region
    $region10: #{tpu_custom_call.1} parent=1 // pred_check
      _
    $region11: #{tpu_custom_call.1} parent=1 // pred_check_branch
      %53 = sbr.rel (0) target = $region13
    $region12: #{tpu_custom_call.1} parent=1 // pred_region
      %s54 = sadd.s32 0, 0
      %p55 = scmp.lt.s32.totalorder %s54, 0
      %s56 = scalar_select %p55, %s54, 0
      %s57 = smul.u32 4, %s56
      %59 = vsyncadd [#allocation8], 0
      %s60 = smul.addr %s57, 8
      %s61 = scalar_lea.hbm %s2, %s60
      %s62 = sshll.u32 %s61, 4
      %s63 = int_to_ptr.hbm [resolvable:$true] %s62
      %s64 = sshll.u32 [#allocation9], 4
      %s65 = int_to_ptr.vmem [resolvable:$true] %s64
      %70 = dma.hbm_to_vmem [thread:$0]  %s63, 512, %s65, [#allocation8], 128, 128, 8
    $region13: #{tpu_custom_call.1} parent=1 // pred_fallthru
      _
    // Predicated region
    $region14: #{tpu_custom_call.1} parent=1 // pred_check
      _
    $region15: #{tpu_custom_call.1} parent=1 // pred_check_branch
      %72 = sbr.rel (0) target = $region17
    $region16: #{tpu_custom_call.1} parent=1 // pred_region
      %74 = dma.done [#allocation5], 512
    $region17: #{tpu_custom_call.1} parent=1 // pred_fallthru
      _
    // Predicated region
    $region18: #{tpu_custom_call.1} parent=1 // pred_check
      _
    $region19: #{tpu_custom_call.1} parent=1 // pred_check_branch
      %76 = sbr.rel (0) target = $region21
    $region20: #{tpu_custom_call.1} parent=1 // pred_region
      %78 = dma.done [#allocation8], 512
    $region21: #{tpu_custom_call.1} parent=1 // pred_fallthru
      _
    // Predicated region
    $region22: #{tpu_custom_call.1} parent=1 // pred_check
      _
    $region23: #{tpu_custom_call.1} parent=1 // pred_check_branch
      %80 = sbr.rel (0) target = $region25
    $region24: #{tpu_custom_call.1} parent=1 // pred_region
      %82 = dma.done [#allocation8], 512
    $region25: #{tpu_custom_call.1} parent=1 // pred_fallthru
      _
    %s83 = sadd.s32 0, 0
    %p84 = scmp.lt.s32.totalorder %s83, 0
    %s85 = scalar_select %p84, %s83, 0
    %s86 = smul.u32 4, %s85
    %s87 = sadd.s32 0, 0
    %p88 = scmp.lt.s32.totalorder %s87, 0
    %s89 = scalar_select %p88, %s87, 0
    %s90 = smul.u32 4, %s89
    %s91 = sadd.s32 0, 0
    %p92 = scmp.lt.s32.totalorder %s91, 0
    %s93 = scalar_select %p92, %s91, 0
    %s94 = smul.u32 4, %s93
    %p95 = scmp.eq.s32.totalorder 0, 0
    // Predicated region
    $region26: #{tpu_custom_call.1} parent=1 // pred_check
      %p96 = pneg %p95
    $region27: #{tpu_custom_call.1} parent=1 // pred_check_branch
      %98 = sbr.rel (%p96) target = $region29
    $region28: #{tpu_custom_call.1} parent=1 // pred_region
      %99 = vst [vmem:[#allocation2] sm:$0xff] 0.0
      %100 = vst [vmem:[#allocation2 + $0x8] sm:$0xff] 0.0
      %101 = vst [vmem:[#allocation2 + $0x10] sm:$0xff] 0.0
      %102 = vst [vmem:[#allocation2 + $0x18] sm:$0xff] 0.0
      %103 = vst [vmem:[#allocation3] sm:$0xff] 0.0
      %104 = vst [vmem:[#allocation3 + $0x8] sm:$0xff] 0.0
      %105 = vst [vmem:[#allocation3 + $0x10] sm:$0xff] 0.0
      %106 = vst [vmem:[#allocation3 + $0x18] sm:$0xff] 0.0
    $region29: #{tpu_custom_call.1} parent=1 // pred_fallthru
      _
    %v107 = vld [vmem:[#allocation4] sm:$0xff]
    %v108 = vld [vmem:[#allocation4 + $0x8] sm:$0xff]
    %v109 = vld [vmem:[#allocation4 + $0x10] sm:$0xff]
    %v110 = vld [vmem:[#allocation4 + $0x18] sm:$0xff]
    %v111 = vld [vmem:[#allocation7] sm:$0xff]
    %v112 = vld [vmem:[#allocation7 + $0x8] sm:$0xff]
    %v113 = vld [vmem:[#allocation7 + $0x10] sm:$0xff]
    %v114 = vld [vmem:[#allocation7 + $0x18] sm:$0xff]
    %v115 = vld [vmem:[#allocation9] sm:$0xff]
    %v116 = vld [vmem:[#allocation9 + $0x8] sm:$0xff]
    %v117 = vld [vmem:[#allocation9 + $0x10] sm:$0xff]
    %v118 = vld [vmem:[#allocation9 + $0x18] sm:$0xff]
    %v119 = vsub.f32 %v107, %v111
    %v120 = vsub.f32 %v108, %v112
    %v121 = vsub.f32 %v109, %v113
    %v122 = vsub.f32 %v110, %v114
    %v123 = vand.u32 2147483647, %v119
    %v124 = vand.u32 2147483647, %v120
    %v125 = vand.u32 2147483647, %v121
    %v126 = vand.u32 2147483647, %v122
    %v127 = vmul.f32 %v123, -2.0
    %v128 = vmul.f32 %v124, -2.0
    %v129 = vmul.f32 %v125, -2.0
    %v130 = vmul.f32 %v126, -2.0
    %v131 = vmul.f32 %v127, 1.442695
    %v132 = vpow.pop %v131
    %v133 = vmul.f32 %v128, 1.442695
    %v134 = vpow.pop %v133
    %v135 = vmul.f32 %v129, 1.442695
    %v136 = vpow.pop %v135
    %v137 = vmul.f32 %v130, 1.442695
    %v138 = vpow.pop %v137
    %v139 = vadd.f32 %v132, 1.0
    %v140 = vadd.f32 %v134, 1.0
    %v141 = vadd.f32 %v136, 1.0
    %v142 = vadd.f32 %v138, 1.0
    %v143 = vlog2.pop %v139
    %v144 = vmul.f32 %v143, 0.6931472
    %v145 = vlog2.pop %v140
    %v146 = vmul.f32 %v145, 0.6931472
    %v147 = vlog2.pop %v141
    %v148 = vmul.f32 %v147, 0.6931472
    %v149 = vlog2.pop %v142
    %v150 = vmul.f32 %v149, 0.6931472
    %v151 = vadd.f32 %v123, %v144
    %v152 = vadd.f32 %v124, %v146
    %v153 = vadd.f32 %v125, %v148
    %v154 = vadd.f32 %v126, %v150
    %v155 = vsub.f32 %v151, 0.6931472
    %v156 = vsub.f32 %v152, 0.6931472
    %v157 = vsub.f32 %v153, 0.6931472
    %v158 = vsub.f32 %v154, 0.6931472
    %v159 = vmul.f32 %v155, %v115
    %v160 = vmul.f32 %v156, %v116
    %v161 = vmul.f32 %v157, %v117
    %v162 = vmul.f32 %v158, %v118
    %v163 = vld [vmem:[#allocation2] sm:$0xff]
    %v164 = vld [vmem:[#allocation2 + $0x8] sm:$0xff]
    %v165 = vld [vmem:[#allocation2 + $0x10] sm:$0xff]
    %v166 = vld [vmem:[#allocation2 + $0x18] sm:$0xff]
    %v167 = vadd.f32 %v159, 0.0
    %v168 = vadd.f32 %v160, 0.0
    %v169 = vadd.f32 %v161, 0.0
    %v170 = vadd.f32 %v162, 0.0
    %v171 = vadd.f32 %v163, %v167
    %v172 = vadd.f32 %v164, %v168
    %v173 = vadd.f32 %v165, %v169
    %v174 = vadd.f32 %v166, %v170
    %175 = vst [vmem:[#allocation2] sm:$0xff] %v171
    %176 = vst [vmem:[#allocation2 + $0x8] sm:$0xff] %v172
    %177 = vst [vmem:[#allocation2 + $0x10] sm:$0xff] %v173
    %178 = vst [vmem:[#allocation2 + $0x18] sm:$0xff] %v174
    %v179 = vld [vmem:[#allocation3] sm:$0xff]
    %v180 = vld [vmem:[#allocation3 + $0x8] sm:$0xff]
    %v181 = vld [vmem:[#allocation3 + $0x10] sm:$0xff]
    %v182 = vld [vmem:[#allocation3 + $0x18] sm:$0xff]
    %v183 = vadd.f32 %v115, 0.0
    %v184 = vadd.f32 %v116, 0.0
    %v185 = vadd.f32 %v117, 0.0
    %v186 = vadd.f32 %v118, 0.0
    %v187 = vadd.f32 %v179, %v183
    %v188 = vadd.f32 %v180, %v184
    %v189 = vadd.f32 %v181, %v185
    %v190 = vadd.f32 %v182, %v186
    %191 = vst [vmem:[#allocation3] sm:$0xff] %v187
    %192 = vst [vmem:[#allocation3 + $0x8] sm:$0xff] %v188
    %193 = vst [vmem:[#allocation3 + $0x10] sm:$0xff] %v189
    %194 = vst [vmem:[#allocation3 + $0x18] sm:$0xff] %v190
    // Predicated region
    $region30: #{tpu_custom_call.1} parent=1 // pred_check
      %p195 = pneg %p95
    $region31: #{tpu_custom_call.1} parent=1 // pred_check_branch
      %197 = sbr.rel (%p195) target = $region33
    $region32: #{tpu_custom_call.1} parent=1 // pred_region
      %v198 = vld [vmem:[#allocation2] sm:$0xff]
      %v199 = vld [vmem:[#allocation2 + $0x8] sm:$0xff]
      %v200 = vld [vmem:[#allocation2 + $0x10] sm:$0xff]
      %v201 = vld [vmem:[#allocation2 + $0x18] sm:$0xff]
      %202 = vst [vmem:[#allocation10] sm:$0xff] %v198
      %203 = vst [vmem:[#allocation10 + $0x8] sm:$0xff] %v199
      %204 = vst [vmem:[#allocation10 + $0x10] sm:$0xff] %v200
      %205 = vst [vmem:[#allocation10 + $0x18] sm:$0xff] %v201
      %v206 = vld [vmem:[#allocation3] sm:$0xff]
      %v207 = vld [vmem:[#allocation3 + $0x8] sm:$0xff]
      %v208 = vld [vmem:[#allocation3 + $0x10] sm:$0xff]
      %v209 = vld [vmem:[#allocation3 + $0x18] sm:$0xff]
      %210 = vst [vmem:[#allocation11] sm:$0xff] %v206
      %211 = vst [vmem:[#allocation11 + $0x8] sm:$0xff] %v207
      %212 = vst [vmem:[#allocation11 + $0x10] sm:$0xff] %v208
      %213 = vst [vmem:[#allocation11 + $0x18] sm:$0xff] %v209
    $region33: #{tpu_custom_call.1} parent=1 // pred_fallthru
      _
    // Predicated region
    $region34: #{tpu_custom_call.1} parent=1 // pred_check
      _
    $region35: #{tpu_custom_call.1} parent=1 // pred_check_branch
      %215 = sbr.rel (0) target = $region37
    $region36: #{tpu_custom_call.1} parent=1 // pred_region
      %217 = vsyncadd [#allocation6], 0
      %s218 = sshll.u32 [#allocation10], 4
      %s219 = int_to_ptr.vmem [resolvable:$true] %s218
      %s220 = sshll.u32 %s3, 4
      %s221 = int_to_ptr.hbm [resolvable:$true] %s220
      %226 = dma.vmem_to_hbm [thread:$0]  %s219, 512, %s221, [#allocation6], 128, 128, 8
    $region37: #{tpu_custom_call.1} parent=1 // pred_fallthru
      _
    // Predicated region
    $region38: #{tpu_custom_call.1} parent=1 // pred_check
      _
    $region39: #{tpu_custom_call.1} parent=1 // pred_check_branch
      %228 = sbr.rel (0) target = $region41
    $region40: #{tpu_custom_call.1} parent=1 // pred_region
      %230 = vsyncadd [#allocation12], 0
      %s231 = sshll.u32 [#allocation11], 4
      %s232 = int_to_ptr.vmem [resolvable:$true] %s231
      %s233 = sshll.u32 %s4, 4
      %s234 = int_to_ptr.hbm [resolvable:$true] %s233
      %239 = dma.vmem_to_hbm [thread:$0]  %s232, 512, %s234, [#allocation12], 128, 128, 8
    $region41: #{tpu_custom_call.1} parent=1 // pred_fallthru
      _
    // Predicated region
    $region42: #{tpu_custom_call.1} parent=1 // pred_check
      _
    $region43: #{tpu_custom_call.1} parent=1 // pred_check_branch
      %241 = sbr.rel (0) target = $region45
    $region44: #{tpu_custom_call.1} parent=1 // pred_region
      %243 = dma.done [#allocation6], 512
    $region45: #{tpu_custom_call.1} parent=1 // pred_fallthru
      _
    // Predicated region
    $region46: #{tpu_custom_call.1} parent=1 // pred_check
      _
    $region47: #{tpu_custom_call.1} parent=1 // pred_check_branch
      %245 = sbr.rel (0) target = $region49
    $region48: #{tpu_custom_call.1} parent=1 // pred_region
      %247 = dma.done [#allocation12], 512
    $region49: #{tpu_custom_call.1} parent=1 // pred_fallthru
      _
    %248 = vsyncpa [#allocation5], 1
    %249 = vsyncpa [#allocation8], 1
    %250 = vsyncpa [#allocation6], 1
    %251 = vsyncpa [#allocation12], 1

</llo_original>
